<compile_context>
chip_gen: v6e
topology: v6e:2x2x1
jax: 0.10.0
libtpu: 0.0.40
codegen_flags: <defaults>
</compile_context>

<pallas_src>
import functools

import jax
import jax.numpy as jnp
from jax.experimental import pallas as pl
from jax.experimental.pallas import tpu as pltpu

LOG_SIG_MAX = 2.0
LOG_SIG_MIN = -20.0

_OUT_PAD = 128    # lane-dense fused-head output columns ([mean | log_std | 0...])
_TB_CAP = 4096    # max batch rows per grid step (~1.1 KB/row, double-buffered)


def gaussian_policy_kernel(x_ref, w1_ref, b1_ref, w2_ref, b2_ref,
                           wh_ref, bh_ref, lo_ref, hi_ref, out_ref):
    # layer 1 (fake-noise features already concatenated into x in the wrapper)
    h1 = jnp.dot(x_ref[...], w1_ref[...], preferred_element_type=jnp.float32)
    h1 = jnp.maximum(h1 + b1_ref[...], 0.0)            # f32 elementwise
    # layer 2
    h2 = jnp.dot(h1.astype(w2_ref.dtype), w2_ref[...],
                 preferred_element_type=jnp.float32)
    h2 = jnp.maximum(h2 + b2_ref[...], 0.0)
    # fused heads: one lane-dense (tb, 128) store; per-column lo/hi vectors
    # implement the log_std clamp (mean columns get +-f32max, pad columns 0).
    y = jnp.dot(h2.astype(wh_ref.dtype), wh_ref[...],
                preferred_element_type=jnp.float32) + bh_ref[...]
    out_ref[...] = jnp.minimum(jnp.maximum(y, lo_ref[...]), hi_ref[...])


def _round_up(x, m):
    return ((x + m - 1) // m) * m


def _batch_tiling(batch):
    """Returns (batch_tile, padded_batch)."""
    if batch <= _TB_CAP:
        tb = _round_up(batch, 8)          # single sublane-aligned block
        return tb, tb
    # Large batch: fixed cap, even grid so v7x can split it across both TCs.
    padded = _round_up(batch, 2 * _TB_CAP)
    return _TB_CAP, padded


@functools.partial(jax.jit, static_argnames=("action_dim",))
def gaussian_policy_forward(state, noise, w1, b1, w2, b2, wh, bh, lo, hi,
                            *, action_dim):
    """state: (B, state_dim), noise: (B, num_fake). Returns (mean, log_std)."""
    batch = state.shape[0]
    cdt = w1.dtype                                        # bf16 matmul operands
    # add_fake_features: concat in the wrapper (single K=d_in dot in-kernel).
    x = jnp.concatenate([state, noise], axis=1).astype(cdt)
    # permute_features(state, None) -> identity.
    d_in = x.shape[1]
    hid = w2.shape[0]

    tb, padded = _batch_tiling(batch)
    if padded != batch:
        x = jnp.pad(x, ((0, padded - batch), (0, 0)))
    grid = (padded // tb,)

    kind = getattr(jax.devices()[0], "device_kind", "").lower()
    if "v7" in kind and grid[0] >= 2 and grid[0] % 2 == 0:
        dim_sem = (pltpu.CORE_PARALLEL,)   # actually split batch over 2 TCs
    else:
        dim_sem = ("arbitrary",)           # v5e/v6e: single TC

    tiled = lambda i: (i, 0)               # batch-tiled arrays
    resident = lambda i: (0, 0)            # weights / vectors stay VMEM-resident

    fused = pl.pallas_call(
        gaussian_policy_kernel,
        out_shape=jax.ShapeDtypeStruct((padded, _OUT_PAD), jnp.float32),
        grid=grid,
        in_specs=[
            pl.BlockSpec((tb, d_in), tiled),
            pl.BlockSpec((d_in, hid), resident),
            pl.BlockSpec((1, hid), resident),
            pl.BlockSpec((hid, hid), resident),
            pl.BlockSpec((1, hid), resident),
            pl.BlockSpec((hid, _OUT_PAD), resident),
            pl.BlockSpec((1, _OUT_PAD), resident),
            pl.BlockSpec((1, _OUT_PAD), resident),
            pl.BlockSpec((1, _OUT_PAD), resident),
        ],
        out_specs=pl.BlockSpec((tb, _OUT_PAD), tiled),
        compiler_params=pltpu.CompilerParams(dimension_semantics=dim_sem),
    )(x, w1, b1, w2, b2, wh, bh, lo, hi)

    mean = fused[:batch, :action_dim]
    log_std = fused[:batch, action_dim:2 * action_dim]
    return mean, log_std


def xavier_uniform(key, out_features, in_features):
    """torch.nn.init.xavier_uniform_ (gain=1) on a PyTorch (out, in) weight."""
    bound = jnp.sqrt(6.0 / (in_features + out_features))
    return jax.random.uniform(key, (out_features, in_features),
                              minval=-bound, maxval=bound, dtype=jnp.float32)


def make_params(key, state_dim, num_fake, hidden_dim, action_dim,
                pad_hidden_to=128, operand_dtype=jnp.bfloat16):
    """Deterministic init (xavier weights, zero biases) -> kernel layout.

    Returns (kernel_params, f32_reference_params).  Kernel layout:
      W1: (d_in, Hp); heads fused and lane-padded: Wh (Hp, 128), bh/lo/hi
      (1, 128); hidden zero-padded to Hp=pad_hidden_to; matmul operands in
      `operand_dtype`, biases / clamp vectors f32.
    """
    d_in = state_dim + num_fake
    k1, k2, km, ks = jax.random.split(key, 4)
    w1 = xavier_uniform(k1, hidden_dim, d_in).T          # (d_in, H)
    w2 = xavier_uniform(k2, hidden_dim, hidden_dim).T    # (H, H)
    wm = xavier_uniform(km, action_dim, hidden_dim).T    # (H, A)
    ws = xavier_uniform(ks, action_dim, hidden_dim).T    # (H, A)
    b1 = jnp.zeros((1, hidden_dim), jnp.float32)
    b2 = jnp.zeros((1, hidden_dim), jnp.float32)
    bm = jnp.zeros((1, action_dim), jnp.float32)
    bs = jnp.zeros((1, action_dim), jnp.float32)
    ref = dict(w1=w1, b1=b1, w2=w2, b2=b2, wm=wm, bm=bm, ws=ws, bs=bs)

    hp = max(hidden_dim, pad_hidden_to)
    hpad = hp - hidden_dim
    two_a = 2 * action_dim
    assert two_a <= _OUT_PAD, "2*action_dim must fit in the 128-lane padded head"
    opad = _OUT_PAD - two_a

    w1p = jnp.pad(w1, ((0, 0), (0, hpad)))
    w2p = jnp.pad(w2, ((0, hpad), (0, hpad)))
    whp = jnp.pad(jnp.concatenate([wm, ws], axis=1), ((0, hpad), (0, opad)))
    b1p = jnp.pad(b1, ((0, 0), (0, hpad)))
    b2p = jnp.pad(b2, ((0, 0), (0, hpad)))
    bhp = jnp.pad(jnp.concatenate([bm, bs], axis=1), ((0, 0), (0, opad)))

    fmax = float(jnp.finfo(jnp.float32).max)
    lo = jnp.concatenate([jnp.full((1, action_dim), -fmax, jnp.float32),
                          jnp.full((1, action_dim), LOG_SIG_MIN, jnp.float32),
                          jnp.zeros((1, opad), jnp.float32)], axis=1)
    hi = jnp.concatenate([jnp.full((1, action_dim), fmax, jnp.float32),
                          jnp.full((1, action_dim), LOG_SIG_MAX, jnp.float32),
                          jnp.zeros((1, opad), jnp.float32)], axis=1)

    kparams = (w1p.astype(operand_dtype), b1p,
               w2p.astype(operand_dtype), b2p,
               whp.astype(operand_dtype), bhp, lo, hi)
    return kparams, ref


if __name__ == "__main__":
    # Small, module-consistent shapes.
    batch = 8
    state_dim = 12
    num_fake_features = 4
    hidden_dim = 32                # args.num_hid_neurons
    action_dim = 4
    fake_noise_std = 0.1

    root = jax.random.PRNGKey(0)
    k_state, k_noise, k_params = jax.random.split(root, 3)

    kparams, ref_p = make_params(k_params, state_dim, num_fake_features,
                                 hidden_dim, action_dim)

    state = jax.random.normal(k_state, (batch, state_dim), dtype=jnp.float32)
    noise = fake_noise_std * jax.random.normal(
        k_noise, (batch, num_fake_features), dtype=jnp.float32)

    mean, log_std = gaussian_policy_forward(state, noise, *kparams,
                                            action_dim=action_dim)
    jax.block_until_ready((mean, log_std))

    # Pure-JAX f32 reference of the module's forward.
    state_full = jnp.concatenate([state, noise], axis=1)   # add_fake_features
    # permute_features(state, None) -> identity.
    h1 = jnp.maximum(state_full @ ref_p["w1"] + ref_p["b1"], 0.0)
    h2 = jnp.maximum(h1 @ ref_p["w2"] + ref_p["b2"], 0.0)
    mean_ref = h2 @ ref_p["wm"] + ref_p["bm"]
    logstd_ref = jnp.clip(h2 @ ref_p["ws"] + ref_p["bs"],
                          LOG_SIG_MIN, LOG_SIG_MAX)

    assert mean.shape == (batch, action_dim)
    assert log_std.shape == (batch, action_dim)
    # bf16 matmul operands (f32 accumulation) -> relaxed tolerance vs f32 ref.
    assert jnp.allclose(mean, mean_ref, atol=5e-2, rtol=5e-2), \
        float(jnp.max(jnp.abs(mean - mean_ref)))
    assert jnp.allclose(log_std, logstd_ref, atol=5e-2, rtol=5e-2), \
        float(jnp.max(jnp.abs(log_std - logstd_ref)))
    assert bool(jnp.all(log_std <= LOG_SIG_MAX))
    assert bool(jnp.all(log_std >= LOG_SIG_MIN))

    print("KERNEL_OK")
</pallas_src>

<mosaic_0001>
module attributes {stable_mosaic.version = 11 : i64} {
  func.func @gaussian_policy_kernel(%arg0: i32, %arg1: memref<8x16xbf16, #tpu.memory_space<vmem>>, %arg2: memref<16x128xbf16, #tpu.memory_space<vmem>>, %arg3: memref<1x128xf32, #tpu.memory_space<vmem>>, %arg4: memref<128x128xbf16, #tpu.memory_space<vmem>>, %arg5: memref<1x128xf32, #tpu.memory_space<vmem>>, %arg6: memref<128x128xbf16, #tpu.memory_space<vmem>>, %arg7: memref<1x128xf32, #tpu.memory_space<vmem>>, %arg8: memref<1x128xf32, #tpu.memory_space<vmem>>, %arg9: memref<1x128xf32, #tpu.memory_space<vmem>>, %arg10: memref<8x128xf32, #tpu.memory_space<vmem>>) attributes {dimension_semantics = [#tpu.dimension_semantics<arbitrary>], iteration_bounds = array<i64: 1>, scalar_prefetch = 0 : i64, scratch_operands = 0 : i64, tpu.core_type = #tpu.core_type<tc>, window_params = [{transform_indices = @transform_0, window_bounds = array<i64: 8, 16>}, {pipeline_mode = #tpu.pipeline_mode<synchronous>, transform_indices = @transform_1, window_bounds = array<i64: 16, 128>}, {pipeline_mode = #tpu.pipeline_mode<synchronous>, transform_indices = @transform_2, window_bounds = array<i64: 1, 128>}, {pipeline_mode = #tpu.pipeline_mode<synchronous>, transform_indices = @transform_3, window_bounds = array<i64: 128, 128>}, {pipeline_mode = #tpu.pipeline_mode<synchronous>, transform_indices = @transform_4, window_bounds = array<i64: 1, 128>}, {pipeline_mode = #tpu.pipeline_mode<synchronous>, transform_indices = @transform_5, window_bounds = array<i64: 128, 128>}, {pipeline_mode = #tpu.pipeline_mode<synchronous>, transform_indices = @transform_6, window_bounds = array<i64: 1, 128>}, {pipeline_mode = #tpu.pipeline_mode<synchronous>, transform_indices = @transform_7, window_bounds = array<i64: 1, 128>}, {pipeline_mode = #tpu.pipeline_mode<synchronous>, transform_indices = @transform_8, window_bounds = array<i64: 1, 128>}, {transform_indices = @transform_9, window_bounds = array<i64: 8, 128>}]} {
    %c0 = arith.constant 0 : index
    %c0_0 = arith.constant 0 : index
    %0 = vector.load %arg1[%c0, %c0_0] : memref<8x16xbf16, #tpu.memory_space<vmem>>, vector<8x16xbf16>
    %c0_1 = arith.constant 0 : index
    %c0_2 = arith.constant 0 : index
    %1 = vector.load %arg2[%c0_1, %c0_2] : memref<16x128xbf16, #tpu.memory_space<vmem>>, vector<16x128xbf16>
    %cst = arith.constant dense<0.000000e+00> : vector<8x128xf32>
    %2 = tpu.matmul %0, %1, %cst {dimension_numbers = #tpu.dot_dimension_numbers<[1], [0], [0], [1], [0, 0, 1, 1], [], []>} : vector<8x16xbf16>, vector<16x128xbf16>, vector<8x128xf32> -> vector<8x128xf32>
    %c0_3 = arith.constant 0 : index
    %c0_4 = arith.constant 0 : index
    %3 = vector.load %arg3[%c0_3, %c0_4] : memref<1x128xf32, #tpu.memory_space<vmem>>, vector<1x128xf32>
    %4 = vector.broadcast %3 : vector<1x128xf32> to vector<8x128xf32>
    %5 = arith.addf %2, %4 : vector<8x128xf32>
    %cst_5 = arith.constant 0.000000e+00 : f32
    %6 = vector.broadcast %cst_5 : f32 to vector<8x128xf32>
    %7 = arith.maximumf %5, %6 : vector<8x128xf32>
    %8 = arith.truncf %7 : vector<8x128xf32> to vector<8x128xbf16>
    %c0_6 = arith.constant 0 : index
    %c0_7 = arith.constant 0 : index
    %9 = vector.load %arg4[%c0_6, %c0_7] : memref<128x128xbf16, #tpu.memory_space<vmem>>, vector<128x128xbf16>
    %cst_8 = arith.constant dense<0.000000e+00> : vector<8x128xf32>
    %10 = tpu.matmul %8, %9, %cst_8 {dimension_numbers = #tpu.dot_dimension_numbers<[1], [0], [0], [1], [0, 0, 1, 1], [], []>} : vector<8x128xbf16>, vector<128x128xbf16>, vector<8x128xf32> -> vector<8x128xf32>
    %c0_9 = arith.constant 0 : index
    %c0_10 = arith.constant 0 : index
    %11 = vector.load %arg5[%c0_9, %c0_10] : memref<1x128xf32, #tpu.memory_space<vmem>>, vector<1x128xf32>
    %12 = vector.broadcast %11 : vector<1x128xf32> to vector<8x128xf32>
    %13 = arith.addf %10, %12 : vector<8x128xf32>
    %cst_11 = arith.constant 0.000000e+00 : f32
    %14 = vector.broadcast %cst_11 : f32 to vector<8x128xf32>
    %15 = arith.maximumf %13, %14 : vector<8x128xf32>
    %16 = arith.truncf %15 : vector<8x128xf32> to vector<8x128xbf16>
    %c0_12 = arith.constant 0 : index
    %c0_13 = arith.constant 0 : index
    %17 = vector.load %arg6[%c0_12, %c0_13] : memref<128x128xbf16, #tpu.memory_space<vmem>>, vector<128x128xbf16>
    %cst_14 = arith.constant dense<0.000000e+00> : vector<8x128xf32>
    %18 = tpu.matmul %16, %17, %cst_14 {dimension_numbers = #tpu.dot_dimension_numbers<[1], [0], [0], [1], [0, 0, 1, 1], [], []>} : vector<8x128xbf16>, vector<128x128xbf16>, vector<8x128xf32> -> vector<8x128xf32>
    %c0_15 = arith.constant 0 : index
    %c0_16 = arith.constant 0 : index
    %19 = vector.load %arg7[%c0_15, %c0_16] : memref<1x128xf32, #tpu.memory_space<vmem>>, vector<1x128xf32>
    %20 = vector.broadcast %19 : vector<1x128xf32> to vector<8x128xf32>
    %21 = arith.addf %18, %20 : vector<8x128xf32>
    %c0_17 = arith.constant 0 : index
    %c0_18 = arith.constant 0 : index
    %22 = vector.load %arg8[%c0_17, %c0_18] : memref<1x128xf32, #tpu.memory_space<vmem>>, vector<1x128xf32>
    %23 = vector.broadcast %22 : vector<1x128xf32> to vector<8x128xf32>
    %24 = arith.maximumf %21, %23 : vector<8x128xf32>
    %c0_19 = arith.constant 0 : index
    %c0_20 = arith.constant 0 : index
    %25 = vector.load %arg9[%c0_19, %c0_20] : memref<1x128xf32, #tpu.memory_space<vmem>>, vector<1x128xf32>
    %26 = vector.broadcast %25 : vector<1x128xf32> to vector<8x128xf32>
    %27 = arith.minimumf %24, %26 : vector<8x128xf32>
    %c0_21 = arith.constant 0 : index
    %c0_22 = arith.constant 0 : index
    %28 = vector.load %arg10[%c0_21, %c0_22] : memref<8x128xf32, #tpu.memory_space<vmem>>, vector<8x128xf32>
    tpu.vector_store %arg10[%c0_21, %c0_22], %27 {strides = array<i32>} : memref<8x128xf32, #tpu.memory_space<vmem>>, vector<8x128xf32>,
    return
  }
  func.func @transform_0(%arg0: i32) -> (i32, i32) {
    %c0_i32 = arith.constant 0 : i32
    %c0_i32_0 = arith.constant 0 : i32
    return %arg0, %c0_i32 : i32, i32
  }
  func.func @transform_1(%arg0: i32) -> (i32, i32) {
    %c0_i32 = arith.constant 0 : i32
    %c0_i32_0 = arith.constant 0 : i32
    %c0_i32_1 = arith.constant 0 : i32
    return %c0_i32, %c0_i32_0 : i32, i32
  }
  func.func @transform_2(%arg0: i32) -> (i32, i32) {
    %c0_i32 = arith.constant 0 : i32
    %c0_i32_0 = arith.constant 0 : i32
    %c0_i32_1 = arith.constant 0 : i32
    return %c0_i32, %c0_i32_0 : i32, i32
  }
  func.func @transform_3(%arg0: i32) -> (i32, i32) {
    %c0_i32 = arith.constant 0 : i32
    %c0_i32_0 = arith.constant 0 : i32
    %c0_i32_1 = arith.constant 0 : i32
    return %c0_i32, %c0_i32_0 : i32, i32
  }
  func.func @transform_4(%arg0: i32) -> (i32, i32) {
    %c0_i32 = arith.constant 0 : i32
    %c0_i32_0 = arith.constant 0 : i32
    %c0_i32_1 = arith.constant 0 : i32
    return %c0_i32, %c0_i32_0 : i32, i32
  }
  func.func @transform_5(%arg0: i32) -> (i32, i32) {
    %c0_i32 = arith.constant 0 : i32
    %c0_i32_0 = arith.constant 0 : i32
    %c0_i32_1 = arith.constant 0 : i32
    return %c0_i32, %c0_i32_0 : i32, i32
  }
  func.func @transform_6(%arg0: i32) -> (i32, i32) {
    %c0_i32 = arith.constant 0 : i32
    %c0_i32_0 = arith.constant 0 : i32
    %c0_i32_1 = arith.constant 0 : i32
    return %c0_i32, %c0_i32_0 : i32, i32
  }
  func.func @transform_7(%arg0: i32) -> (i32, i32) {
    %c0_i32 = arith.constant 0 : i32
    %c0_i32_0 = arith.constant 0 : i32
    %c0_i32_1 = arith.constant 0 : i32
    return %c0_i32, %c0_i32_0 : i32, i32
  }
  func.func @transform_8(%arg0: i32) -> (i32, i32) {
    %c0_i32 = arith.constant 0 : i32
    %c0_i32_0 = arith.constant 0 : i32
    %c0_i32_1 = arith.constant 0 : i32
    return %c0_i32, %c0_i32_0 : i32, i32
  }
  func.func @transform_9(%arg0: i32) -> (i32, i32) {
    %c0_i32 = arith.constant 0 : i32
    %c0_i32_0 = arith.constant 0 : i32
    return %arg0, %c0_i32 : i32, i32
  }
}

</mosaic_0001>

<llo_original>
// kernel: gaussian_policy_forward.1
$region0: #{gaussian_policy_forward.1}
  #allocation0 [shape = 'u32[]', space=smem, size = 0x4, offset = 0x4, fixed_abs, tag = 'smem constant byte address 0x4 - core index']
  #allocation1 [shape = 'u32[144,128]{1,0:T(1,128)}', space=vmem, size = 0x12000, scoped, tag = 'internal scratch']
  %s0 = inlined_call_operand.vmem [shape: bf16[8,16], index: 0, kind: input, shape index: {}]
  %s1 = inlined_call_operand.vmem [shape: bf16[16,128], index: 1, kind: input, shape index: {}]
  %s2 = inlined_call_operand.vmem [shape: f32[1,128], index: 2, kind: input, shape index: {}]
  %s3 = inlined_call_operand.hbm [shape: bf16[128,128], index: 3, kind: input, shape index: {}]
  %s4 = inlined_call_operand.vmem [shape: f32[1,128], index: 4, kind: input, shape index: {}]
  %s5 = inlined_call_operand.hbm [shape: bf16[128,128], index: 5, kind: input, shape index: {}]
  %s6 = inlined_call_operand.vmem [shape: f32[1,128], index: 6, kind: input, shape index: {}]
  %s7 = inlined_call_operand.vmem [shape: f32[1,128], index: 7, kind: input, shape index: {}]
  %s8 = inlined_call_operand.vmem [shape: f32[1,128], index: 8, kind: input, shape index: {}]
  %s9 = inlined_call_operand.vmem [shape: f32[8,128], index: 9, kind: output, shape index: {}]
  %s10 = sld [smem:[#allocation0]]
  $region54: #{gaussian_policy_forward.1} parent=0
    _
  %s12 = ssub.s32 1, %s10
  %s13 = scalar_select 0, %s12, %s10
  $region1: #{gaussian_policy_forward.1} parent=0
    #allocation2 [shape = 'u8[32768]{0}', space=vmem, size = 0x8000, scoped, tag = 'input window, operand 3, single buffered']
    #allocation3 [shape = 's32[1]{0}', space=sflag, size = 0x4, scoped, tag = 'scoped memory for gaussian_policy_forward.1']
    #allocation4 [shape = 'u8[32768]{0}', space=vmem, size = 0x8000, scoped, tag = 'input window, operand 5, single buffered']
    #allocation5 [shape = 's32[1]{0}', space=sflag, size = 0x4, scoped, tag = 'scoped memory for gaussian_policy_forward.1']
    %14 = vsyncpa [#allocation3], 0
    %15 = vsyncpa [#allocation5], 0
    // Predicated region
    $region2: #{gaussian_policy_forward.1} parent=1 // pred_check
      _
    $region3: #{gaussian_policy_forward.1} parent=1 // pred_check_branch
      %17 = sbr.rel (0) target = $region5
    $region4: #{gaussian_policy_forward.1} parent=1 // pred_region
      _
    $region5: #{gaussian_policy_forward.1} parent=1 // pred_fallthru
      _
    // Predicated region
    $region6: #{gaussian_policy_forward.1} parent=1 // pred_check
      _
    $region7: #{gaussian_policy_forward.1} parent=1 // pred_check_branch
      %19 = sbr.rel (0) target = $region9
    $region8: #{gaussian_policy_forward.1} parent=1 // pred_region
      _
    $region9: #{gaussian_policy_forward.1} parent=1 // pred_fallthru
      _
    // Predicated region
    $region10: #{gaussian_policy_forward.1} parent=1 // pred_check
      _
    $region11: #{gaussian_policy_forward.1} parent=1 // pred_check_branch
      %21 = sbr.rel (0) target = $region13
    $region12: #{gaussian_policy_forward.1} parent=1 // pred_region
      _
    $region13: #{gaussian_policy_forward.1} parent=1 // pred_fallthru
      _
    // Predicated region
    $region14: #{gaussian_policy_forward.1} parent=1 // pred_check
      _
    $region15: #{gaussian_policy_forward.1} parent=1 // pred_check_branch
      %23 = sbr.rel (0) target = $region17
    $region16: #{gaussian_policy_forward.1} parent=1 // pred_region
      %s25 = ssub.s32 1024, 1024
      %26 = vsyncadd [#allocation3], %s25
      %s27 = sshll.u32 [#allocation2], 4
      %s28 = int_to_ptr.vmem [resolvable:$true] %s27
      %33 = dma.hbm_to_vmem [thread:$0]  %s3, 1024, %s28, [#allocation3], 64, 64, 4
    $region17: #{gaussian_policy_forward.1} parent=1 // pred_fallthru
      _
    // Predicated region
    $region18: #{gaussian_policy_forward.1} parent=1 // pred_check
      _
    $region19: #{gaussian_policy_forward.1} parent=1 // pred_check_branch
      %35 = sbr.rel (0) target = $region21
    $region20: #{gaussian_policy_forward.1} parent=1 // pred_region
      _
    $region21: #{gaussian_policy_forward.1} parent=1 // pred_fallthru
      _
    // Predicated region
    $region22: #{gaussian_policy_forward.1} parent=1 // pred_check
      _
    $region23: #{gaussian_policy_forward.1} parent=1 // pred_check_branch
      %37 = sbr.rel (0) target = $region25
    $region24: #{gaussian_policy_forward.1} parent=1 // pred_region
      %s39 = ssub.s32 1024, 1024
      %40 = vsyncadd [#allocation5], %s39
      %s41 = sshll.u32 [#allocation4], 4
      %s42 = int_to_ptr.vmem [resolvable:$true] %s41
      %47 = dma.hbm_to_vmem [thread:$0]  %s5, 1024, %s42, [#allocation5], 64, 64, 4
    $region25: #{gaussian_policy_forward.1} parent=1 // pred_fallthru
      _
    // Predicated region
    $region26: #{gaussian_policy_forward.1} parent=1 // pred_check
      _
    $region27: #{gaussian_policy_forward.1} parent=1 // pred_check_branch
      %49 = sbr.rel (0) target = $region29
    $region28: #{gaussian_policy_forward.1} parent=1 // pred_region
      _
    $region29: #{gaussian_policy_forward.1} parent=1 // pred_fallthru
      _
    // Predicated region
    $region30: #{gaussian_policy_forward.1} parent=1 // pred_check
      _
    $region31: #{gaussian_policy_forward.1} parent=1 // pred_check_branch
      %51 = sbr.rel (0) target = $region33
    $region32: #{gaussian_policy_forward.1} parent=1 // pred_region
      _
    $region33: #{gaussian_policy_forward.1} parent=1 // pred_fallthru
      _
    // Predicated region
    $region34: #{gaussian_policy_forward.1} parent=1 // pred_check
      _
    $region35: #{gaussian_policy_forward.1} parent=1 // pred_check_branch
      %53 = sbr.rel (0) target = $region37
    $region36: #{gaussian_policy_forward.1} parent=1 // pred_region
      _
    $region37: #{gaussian_policy_forward.1} parent=1 // pred_fallthru
      _
    // Predicated region
    $region38: #{gaussian_policy_forward.1} parent=1 // pred_check
      _
    $region39: #{gaussian_policy_forward.1} parent=1 // pred_check_branch
      %55 = sbr.rel (0) target = $region41
    $region40: #{gaussian_policy_forward.1} parent=1 // pred_region
      %56 = dma.done [#allocation3], 1024
    $region41: #{gaussian_policy_forward.1} parent=1 // pred_fallthru
      _
    // Predicated region
    $region42: #{gaussian_policy_forward.1} parent=1 // pred_check
      _
    $region43: #{gaussian_policy_forward.1} parent=1 // pred_check_branch
      %58 = sbr.rel (0) target = $region45
    $region44: #{gaussian_policy_forward.1} parent=1 // pred_region
      %59 = dma.done [#allocation5], 1024
    $region45: #{gaussian_policy_forward.1} parent=1 // pred_fallthru
      _
    %v61 = vld [vmem:[%s0] sm:$0xf]
    %v62 = vld [vmem:[%s1] sm:$0xf]
    %v63 = vld [vmem:[%s1 + $0x4] sm:$0xf]
    %v64 = vld [vmem:[%s2] sm:$0x1]
    %v66 = vlaneseq
    %v67 = vshrl.u32 %v66, 7
    %v68 = vsub.s32 0, %v67
    %v69 = vrot.slane %v64, %v68
    %v73 = vunpack.c.l.b16 %v62
    %v74 = vunpack.c.l.b16 %v63
    %v75 = vpack.c.b16 %v74, %v73
    %vm77 = vcmask 130048
    %v79 = vsel %vm77, %v61, 0
    %81 = vmatprep.subr.bf16.mxu0 0
    %82 = vmatpush1.bf16.msra.mxu0 0
    %83 = vmatprep.subr.bf16.mxu0 0
    %84 = vmatpush1.bf16.msra.mxu0 0
    %85 = vmatprep.subr.bf16.mxu0 0
    %86 = vmatpush1.bf16.msra.mxu0 0
    %87 = vmatprep.subr.bf16.mxu0 0
    %88 = vmatpush1.bf16.msra.mxu0 0
    %89 = vmatprep.subr.bf16.mxu0 0
    %90 = vmatpush1.bf16.msra.mxu0 0
    %91 = vmatprep.subr.bf16.mxu0 0
    %92 = vmatpush1.bf16.msra.mxu0 0
    %93 = vmatprep.subr.bf16.mxu0 0
    %94 = vmatpush1.bf16.msra.mxu0 0
    %95 = vmatprep.subr.bf16.mxu0 0
    %96 = vmatpush1.bf16.msra.mxu0 %v75
    %97 = vmatprep.subr.bf16.mxu0 0
    %98 = vmatpush2.bf16.msra.mxu0 0
    %99 = vmatprep.subr.bf16.mxu0 0
    %100 = vmatpush2.bf16.msra.mxu0 0
    %101 = vmatprep.subr.bf16.mxu0 0
    %102 = vmatpush2.bf16.msra.mxu0 0
    %103 = vmatprep.subr.bf16.mxu0 0
    %104 = vmatpush2.bf16.msra.mxu0 0
    %105 = vmatprep.subr.bf16.mxu0 0
    %106 = vmatpush2.bf16.msra.mxu0 0
    %107 = vmatprep.subr.bf16.mxu0 0
    %108 = vmatpush2.bf16.msra.mxu0 0
    %109 = vmatprep.subr.bf16.mxu0 0
    %110 = vmatpush2.bf16.msra.mxu0 0
    %111 = vmatprep.subr.bf16.mxu0 0
    %112 = vmatpush2.bf16.msra.mxu0 0
    %113 = vmatprep.mubr.bf16.mxu0 0
    %114 = vmatmul.mubr.bf16.gmra.mxu0 %v79
    %v115 = vpop.f32.mrf.mxu0
    %v116 = vadd.f32 %v69, %v115
    %v117 = vpop.f32.mrf.mxu0
    %v118 = vpop.f32.mrf.mxu0
    %v119 = vpop.f32.mrf.mxu0
    %120 = vdwg.mxu0
    %v121 = vmax.f32 %v116, 0.0
    %v122 = vpack.c.bf16 %v121, %v121
    %v123 = vld [vmem:[#allocation2] sm:$0xf]
    %v124 = vld [vmem:[#allocation2 + $0x4] sm:$0xf]
    %v125 = vld [vmem:[#allocation2 + $0x8] sm:$0xf]
    %v126 = vld [vmem:[#allocation2 + $0xc] sm:$0xf]
    %v127 = vld [vmem:[#allocation2 + $0x10] sm:$0xf]
    %v128 = vld [vmem:[#allocation2 + $0x14] sm:$0xf]
    %v129 = vld [vmem:[#allocation2 + $0x18] sm:$0xf]
    %v130 = vld [vmem:[#allocation2 + $0x1c] sm:$0xf]
    %v131 = vld [vmem:[#allocation2 + $0x20] sm:$0xf]
    %v132 = vld [vmem:[#allocation2 + $0x24] sm:$0xf]
    %v133 = vld [vmem:[#allocation2 + $0x28] sm:$0xf]
    %v134 = vld [vmem:[#allocation2 + $0x2c] sm:$0xf]
    %v135 = vld [vmem:[#allocation2 + $0x30] sm:$0xf]
    %v136 = vld [vmem:[#allocation2 + $0x34] sm:$0xf]
    %v137 = vld [vmem:[#allocation2 + $0x38] sm:$0xf]
    %v138 = vld [vmem:[#allocation2 + $0x3c] sm:$0xf]
    %v139 = vld [vmem:[%s4] sm:$0x1]
    %v141 = vlaneseq
    %v142 = vshrl.u32 %v141, 7
    %v143 = vsub.s32 0, %v142
    %v144 = vrot.slane %v139, %v143
    %v162 = vunpack.c.l.b16 %v123
    %v163 = vunpack.c.l.b16 %v124
    %v164 = vunpack.c.l.b16 %v125
    %v165 = vunpack.c.l.b16 %v126
    %v166 = vunpack.c.l.b16 %v127
    %v167 = vunpack.c.l.b16 %v128
    %v168 = vunpack.c.l.b16 %v129
    %v169 = vunpack.c.l.b16 %v130
    %v170 = vunpack.c.l.b16 %v131
    %v171 = vunpack.c.l.b16 %v132
    %v172 = vunpack.c.l.b16 %v133
    %v173 = vunpack.c.l.b16 %v134
    %v174 = vunpack.c.l.b16 %v135
    %v175 = vunpack.c.l.b16 %v136
    %v176 = vunpack.c.l.b16 %v137
    %v177 = vunpack.c.l.b16 %v138
    %v178 = vpack.c.b16 %v163, %v162
    %v179 = vpack.c.b16 %v165, %v164
    %v180 = vpack.c.b16 %v167, %v166
    %v181 = vpack.c.b16 %v169, %v168
    %v182 = vpack.c.b16 %v171, %v170
    %v183 = vpack.c.b16 %v173, %v172
    %v184 = vpack.c.b16 %v175, %v174
    %v185 = vpack.c.b16 %v177, %v176
    %194 = vmatprep.subr.bf16.mxu0 0
    %195 = vmatpush1.bf16.msra.mxu0 %v185
    %196 = vmatprep.subr.bf16.mxu0 0
    %197 = vmatpush1.bf16.msra.mxu0 %v184
    %198 = vmatprep.subr.bf16.mxu0 0
    %199 = vmatpush1.bf16.msra.mxu0 %v183
    %200 = vmatprep.subr.bf16.mxu0 0
    %201 = vmatpush1.bf16.msra.mxu0 %v182
    %202 = vmatprep.subr.bf16.mxu0 0
    %203 = vmatpush1.bf16.msra.mxu0 %v181
    %204 = vmatprep.subr.bf16.mxu0 0
    %205 = vmatpush1.bf16.msra.mxu0 %v180
    %206 = vmatprep.subr.bf16.mxu0 0
    %207 = vmatpush1.bf16.msra.mxu0 %v179
    %208 = vmatprep.subr.bf16.mxu0 0
    %209 = vmatpush1.bf16.msra.mxu0 %v178
    %210 = vmatprep.subr.bf16.mxu0 0
    %211 = vmatpush2.bf16.msra.mxu0 0
    %212 = vmatprep.subr.bf16.mxu0 0
    %213 = vmatpush2.bf16.msra.mxu0 0
    %214 = vmatprep.subr.bf16.mxu0 0
    %215 = vmatpush2.bf16.msra.mxu0 0
    %216 = vmatprep.subr.bf16.mxu0 0
    %217 = vmatpush2.bf16.msra.mxu0 0
    %218 = vmatprep.subr.bf16.mxu0 0
    %219 = vmatpush2.bf16.msra.mxu0 0
    %220 = vmatprep.subr.bf16.mxu0 0
    %221 = vmatpush2.bf16.msra.mxu0 0
    %222 = vmatprep.subr.bf16.mxu0 0
    %223 = vmatpush2.bf16.msra.mxu0 0
    %224 = vmatprep.subr.bf16.mxu0 0
    %225 = vmatpush2.bf16.msra.mxu0 0
    %226 = vmatprep.mubr.bf16.mxu0 0
    %227 = vmatmul.mubr.bf16.gmra.mxu0 %v122
    %v228 = vpop.f32.mrf.mxu0
    %v229 = vadd.f32 %v144, %v228
    %v230 = vpop.f32.mrf.mxu0
    %v231 = vpop.f32.mrf.mxu0
    %v232 = vpop.f32.mrf.mxu0
    %233 = vdwg.mxu0
    %v234 = vmax.f32 %v229, 0.0
    %v235 = vpack.c.bf16 %v234, %v234
    %v236 = vld [vmem:[#allocation4] sm:$0xf]
    %v237 = vld [vmem:[#allocation4 + $0x4] sm:$0xf]
    %v238 = vld [vmem:[#allocation4 + $0x8] sm:$0xf]
    %v239 = vld [vmem:[#allocation4 + $0xc] sm:$0xf]
    %v240 = vld [vmem:[#allocation4 + $0x10] sm:$0xf]
    %v241 = vld [vmem:[#allocation4 + $0x14] sm:$0xf]
    %v242 = vld [vmem:[#allocation4 + $0x18] sm:$0xf]
    %v243 = vld [vmem:[#allocation4 + $0x1c] sm:$0xf]
    %v244 = vld [vmem:[#allocation4 + $0x20] sm:$0xf]
    %v245 = vld [vmem:[#allocation4 + $0x24] sm:$0xf]
    %v246 = vld [vmem:[#allocation4 + $0x28] sm:$0xf]
    %v247 = vld [vmem:[#allocation4 + $0x2c] sm:$0xf]
    %v248 = vld [vmem:[#allocation4 + $0x30] sm:$0xf]
    %v249 = vld [vmem:[#allocation4 + $0x34] sm:$0xf]
    %v250 = vld [vmem:[#allocation4 + $0x38] sm:$0xf]
    %v251 = vld [vmem:[#allocation4 + $0x3c] sm:$0xf]
    %v252 = vld [vmem:[%s6] sm:$0x1]
    %v254 = vlaneseq
    %v255 = vshrl.u32 %v254, 7
    %v256 = vsub.s32 0, %v255
    %v257 = vrot.slane %v252, %v256
    %v275 = vunpack.c.l.b16 %v236
    %v276 = vunpack.c.l.b16 %v237
    %v277 = vunpack.c.l.b16 %v238
    %v278 = vunpack.c.l.b16 %v239
    %v279 = vunpack.c.l.b16 %v240
    %v280 = vunpack.c.l.b16 %v241
    %v281 = vunpack.c.l.b16 %v242
    %v282 = vunpack.c.l.b16 %v243
    %v283 = vunpack.c.l.b16 %v244
    %v284 = vunpack.c.l.b16 %v245
    %v285 = vunpack.c.l.b16 %v246
    %v286 = vunpack.c.l.b16 %v247
    %v287 = vunpack.c.l.b16 %v248
    %v288 = vunpack.c.l.b16 %v249
    %v289 = vunpack.c.l.b16 %v250
    %v290 = vunpack.c.l.b16 %v251
    %v291 = vpack.c.b16 %v276, %v275
    %v292 = vpack.c.b16 %v278, %v277
    %v293 = vpack.c.b16 %v280, %v279
    %v294 = vpack.c.b16 %v282, %v281
    %v295 = vpack.c.b16 %v284, %v283
    %v296 = vpack.c.b16 %v286, %v285
    %v297 = vpack.c.b16 %v288, %v287
    %v298 = vpack.c.b16 %v290, %v289
    %307 = vmatprep.subr.bf16.mxu0 0
    %308 = vmatpush1.bf16.msra.mxu0 %v298
    %309 = vmatprep.subr.bf16.mxu0 0
    %310 = vmatpush1.bf16.msra.mxu0 %v297
    %311 = vmatprep.subr.bf16.mxu0 0
    %312 = vmatpush1.bf16.msra.mxu0 %v296
    %313 = vmatprep.subr.bf16.mxu0 0
    %314 = vmatpush1.bf16.msra.mxu0 %v295
    %315 = vmatprep.subr.bf16.mxu0 0
    %316 = vmatpush1.bf16.msra.mxu0 %v294
    %317 = vmatprep.subr.bf16.mxu0 0
    %318 = vmatpush1.bf16.msra.mxu0 %v293
    %319 = vmatprep.subr.bf16.mxu0 0
    %320 = vmatpush1.bf16.msra.mxu0 %v292
    %321 = vmatprep.subr.bf16.mxu0 0
    %322 = vmatpush1.bf16.msra.mxu0 %v291
    %323 = vmatprep.subr.bf16.mxu0 0
    %324 = vmatpush2.bf16.msra.mxu0 0
    %325 = vmatprep.subr.bf16.mxu0 0
    %326 = vmatpush2.bf16.msra.mxu0 0
    %327 = vmatprep.subr.bf16.mxu0 0
    %328 = vmatpush2.bf16.msra.mxu0 0
    %329 = vmatprep.subr.bf16.mxu0 0
    %330 = vmatpush2.bf16.msra.mxu0 0
    %331 = vmatprep.subr.bf16.mxu0 0
    %332 = vmatpush2.bf16.msra.mxu0 0
    %333 = vmatprep.subr.bf16.mxu0 0
    %334 = vmatpush2.bf16.msra.mxu0 0
    %335 = vmatprep.subr.bf16.mxu0 0
    %336 = vmatpush2.bf16.msra.mxu0 0
    %337 = vmatprep.subr.bf16.mxu0 0
    %338 = vmatpush2.bf16.msra.mxu0 0
    %339 = vmatprep.mubr.bf16.mxu0 0
    %340 = vmatmul.mubr.bf16.gmra.mxu0 %v235
    %v341 = vpop.f32.mrf.mxu0
    %v342 = vadd.f32 %v257, %v341
    %v343 = vpop.f32.mrf.mxu0
    %v344 = vpop.f32.mrf.mxu0
    %v345 = vpop.f32.mrf.mxu0
    %346 = vdwg.mxu0
    %v347 = vld [vmem:[%s7] sm:$0x1]
    %v349 = vlaneseq
    %v350 = vshrl.u32 %v349, 7
    %v351 = vsub.s32 0, %v350
    %v352 = vrot.slane %v347, %v351
    %v354 = vmax.f32 %v342, %v352
    %v355 = vld [vmem:[%s8] sm:$0x1]
    %v357 = vlaneseq
    %v358 = vshrl.u32 %v357, 7
    %v359 = vsub.s32 0, %v358
    %v360 = vrot.slane %v355, %v359
    %v362 = vmin.f32 %v354, %v360
    %363 = vst [vmem:[%s9] sm:$0xff] %v362
    // Predicated region
    $region46: #{gaussian_policy_forward.1} parent=1 // pred_check
      _
    $region47: #{gaussian_policy_forward.1} parent=1 // pred_check_branch
      %365 = sbr.rel (0) target = $region49
    $region48: #{gaussian_policy_forward.1} parent=1 // pred_region
      _
    $region49: #{gaussian_policy_forward.1} parent=1 // pred_fallthru
      _
    // Predicated region
    $region50: #{gaussian_policy_forward.1} parent=1 // pred_check
      _
    $region51: #{gaussian_policy_forward.1} parent=1 // pred_check_branch
      %367 = sbr.rel (0) target = $region53
    $region52: #{gaussian_policy_forward.1} parent=1 // pred_region
      _
    $region53: #{gaussian_policy_forward.1} parent=1 // pred_fallthru
      _
    %368 = vsyncpa [#allocation3], 1
    %369 = vsyncpa [#allocation5], 1

</llo_original>
